<compile_context>
chip_gen: v5e
topology: v5e:2x2
jax: 0.10.0
libtpu: 0.0.40
codegen_flags: <defaults>
</compile_context>

<pallas_src>
import functools
import math

import jax
import jax.numpy as jnp
from jax.experimental import pallas as pl
from jax.experimental.pallas import tpu as pltpu


_SMALL_BYTES = 2 * 1024 * 1024        # threshold for the single-block VMEM-resident path
_MAX_TILE_BYTES = 16 * 1024 * 1024    # cap on a single streamed x tile
_MAX_LANE_WIDTH = 2048                # target lane-dense flat width (multiple of 128)
_MAX_LCM_WIDTH = 16 * 1024            # give up on lane density past this lcm(hidden, 128)


def _vmem_budget_bytes():
    """Generation-aware scoped-VMEM budget (v7x: 64 MiB physical, v5e/v6e: 128 MiB)."""
    try:
        cap = int(pltpu.get_tpu_info().vmem_capacity_bytes)
    except Exception:
        cap = 64 * 1024 * 1024        # conservative default, safe on every generation
    return max(32 * 1024 * 1024, min(int(cap * 0.6), 80 * 1024 * 1024))


def _pick_width(total, hidden):
    """Lane-dense flat width: a multiple of both 128 and `hidden` (so gamma/beta tile to a
    single broadcast row), preferring one that divides `total` so no padding is needed."""
    base = hidden * 128 // math.gcd(hidden, 128)
    if base > _MAX_LCM_WIDTH:
        # TODO(synk): pathological hidden (huge and 128-unfriendly) -> falls back to the
        # natural row width (possibly masked stores / very wide rows).
        return hidden
    cap = max(base, _MAX_LANE_WIDTH)
    cands = list(range(base, cap + 1, base))
    for w in reversed(cands):
        if total % w == 0:
            return w
    return cands[-1]                  # no exact divisor: wrapper zero-pads the flat tail


def _pick_row_tile(rows, width, itemsize, budget):
    """Largest row tile (multiple of 8) fitting double-buffered in+out plus the f32 working
    set inside the VMEM budget; prefer a divisor of `rows` to avoid an x-padding copy."""
    per_row = width * (4 * itemsize + 8)      # 2x in-buf + 2x out-buf + f32 temporaries
    tr = min(budget // per_row, _MAX_TILE_BYTES // (width * itemsize), rows)
    tr = max(8, (tr // 8) * 8)
    if rows % tr:
        for t in range(tr, max(7, tr // 2 - 1), -8):
            if rows % t == 0:
                return t
    return tr


def _small_kernel(x_ref, gamma_ref, beta_ref, o_ref, *, n_elems, eps):
    """Single-block path: whole tensor resident in VMEM; stats + normalize in one shot."""
    x = x_ref[...].astype(jnp.float32)
    s = jnp.sum(x)
    sq = jnp.sum(x * x)
    mean = s / n_elems
    denom = n_elems - 1.0 if n_elems > 1.0 else 1.0      # ddof=1 guard for n==1
    var = jnp.maximum((sq - s * mean) / denom, 0.0)
    inv = 1.0 / (jnp.sqrt(var) + eps)                     # eps added to std, as in the module
    scale = gamma_ref[...].astype(jnp.float32) * inv
    shift = beta_ref[...].astype(jnp.float32) - mean * scale
    o_ref[...] = (x * scale + shift).astype(o_ref.dtype)


def _fused_kernel(x_ref, gamma_ref, beta_ref, o_ref,
                  acc_sum, acc_sq, scale_sc, shift_sc, *, n_elems, eps, tr):
    p = pl.program_id(0)      # phase: 0 = reduction sweep, 1 = normalize sweep
    i = pl.program_id(1)      # row tile

    @pl.when((p == 0) & (i == 0))
    def _init():
        acc_sum[...] = jnp.zeros_like(acc_sum)
        acc_sq[...] = jnp.zeros_like(acc_sq)

    @pl.when(p == 0)
    def _accumulate():
        # Per-tile partial reduction over the sublane-slab axis (pure VPU adds, no XLU),
        # then a single (8, W) read-modify-write of the grid-persistent accumulators.
        x = x_ref[...].astype(jnp.float32)
        x3 = x.reshape(tr // 8, 8, x.shape[-1])
        acc_sum[...] += jnp.sum(x3, axis=0)
        acc_sq[...] += jnp.sum(x3 * x3, axis=0)

    @pl.when((p == 1) & (i == 0))
    def _finalize_stats():
        s = jnp.sum(acc_sum[...])          # the only cross-lane (XLU) collapse
        sq = jnp.sum(acc_sq[...])
        mean = s / n_elems
        denom = n_elems - 1.0 if n_elems > 1.0 else 1.0
        # TODO(synk): E[x^2]-form variance in f32 loses precision when |mean| >> std over
        # very large tensors; a shifted / two-sweep accumulation would fix it at extra cost.
        var = jnp.maximum((sq - s * mean) / denom, 0.0)
        inv = 1.0 / (jnp.sqrt(var) + eps)
        g = gamma_ref[...].astype(jnp.float32)
        b = beta_ref[...].astype(jnp.float32)
        scale_sc[...] = g * inv
        shift_sc[...] = b - mean * (g * inv)

    @pl.when(p == 1)
    def _normalize():
        x = x_ref[...].astype(jnp.float32)
        o_ref[...] = (x * scale_sc[...] + shift_sc[...]).astype(o_ref.dtype)


def layer_normalization(x, gamma, beta, eps=1e-6):
    """Pallas TPU implementation of the reference LayerNormalization.forward
    (global mean + unbiased std over the WHOLE tensor, per-hidden gamma/beta)."""
    orig_shape = x.shape
    hidden = int(orig_shape[-1])
    total = int(x.size)
    itemsize = x.dtype.itemsize

    width = _pick_width(total, hidden)
    budget = _vmem_budget_bytes()
    small = total * itemsize <= _SMALL_BYTES

    rows = (total + width - 1) // width
    if small:
        tile_rows = rows
        n_tiles = 1
    else:
        tile_rows = _pick_row_tile(rows, width, itemsize, budget)
        rows = ((rows + tile_rows - 1) // tile_rows) * tile_rows   # pad to a tile multiple
        n_tiles = rows // tile_rows

    padded_total = rows * width
    flat = x.reshape(-1)
    if padded_total != total:
        # Zero padding leaves sum / sum-of-squares unchanged (n_elems uses the real count);
        # the padded tail of the output is sliced off below.
        flat = jnp.pad(flat, (0, padded_total - total))
    x2 = flat.reshape(rows, width)

    reps = width // hidden
    gamma_row = jnp.tile(gamma.astype(jnp.float32), reps).reshape(1, width)
    beta_row = jnp.tile(beta.astype(jnp.float32), reps).reshape(1, width)

    if small:
        out2 = pl.pallas_call(
            functools.partial(_small_kernel, n_elems=float(total), eps=float(eps)),
            out_shape=jax.ShapeDtypeStruct((rows, width), x.dtype),
            grid=(1,),
            in_specs=[
                pl.BlockSpec((rows, width), lambda i: (0, 0)),
                pl.BlockSpec((1, width), lambda i: (0, 0)),
                pl.BlockSpec((1, width), lambda i: (0, 0)),
            ],
            out_specs=pl.BlockSpec((rows, width), lambda i: (0, 0)),
            compiler_params=pltpu.CompilerParams(
                dimension_semantics=("arbitrary",),
                vmem_limit_bytes=budget,
            ),
            cost_estimate=pl.CostEstimate(
                flops=5 * total, transcendentals=1,
                bytes_accessed=2 * padded_total * itemsize),
        )(x2, gamma_row, beta_row)
    else:
        out2 = pl.pallas_call(
            functools.partial(_fused_kernel, n_elems=float(total), eps=float(eps),
                              tr=tile_rows),
            out_shape=jax.ShapeDtypeStruct((rows, width), x.dtype),
            grid=(2, n_tiles),                       # (phase, row tile)
            in_specs=[
                pl.BlockSpec((tile_rows, width), lambda p, i: (i, 0)),
                pl.BlockSpec((1, width), lambda p, i: (0, 0)),
                pl.BlockSpec((1, width), lambda p, i: (0, 0)),
            ],
            # Park the output on block 0 during the reduction phase so every tile is DMA'd
            # back to HBM exactly once, right after phase 1 writes it.
            out_specs=pl.BlockSpec((tile_rows, width), lambda p, i: (i * p, 0)),
            scratch_shapes=[
                pltpu.VMEM((8, width), jnp.float32),   # running sum
                pltpu.VMEM((8, width), jnp.float32),   # running sum of squares
                pltpu.VMEM((1, width), jnp.float32),   # fused scale = gamma / (std + eps)
                pltpu.VMEM((1, width), jnp.float32),   # fused shift = beta - mean * scale
            ],
            compiler_params=pltpu.CompilerParams(
                dimension_semantics=("arbitrary", "arbitrary"),
                vmem_limit_bytes=budget,
            ),
            cost_estimate=pl.CostEstimate(
                flops=5 * total, transcendentals=1,
                bytes_accessed=3 * padded_total * itemsize),
        )(x2, gamma_row, beta_row)

    out = out2.reshape(-1)
    if padded_total != total:
        out = out[:total]
    return out.reshape(orig_shape)


if __name__ == "__main__":
    key = jax.random.PRNGKey(0)

    batch, seq, hidden = 2, 8, 32          # input_dim = hidden = 32
    x = jax.random.normal(key, (batch, seq, hidden), dtype=jnp.float32)

    # Deterministic params, matching nn.Parameter(torch.ones/zeros(input_dim)).
    gamma = jnp.ones((hidden,), dtype=jnp.float32)
    beta = jnp.zeros((hidden,), dtype=jnp.float32)
    eps = 1e-6

    out = layer_normalization(x, gamma, beta, eps=eps)
    out = jax.block_until_ready(out)

    # Pure-JAX reference (global mean, unbiased std), matching the PyTorch module.
    mean = jnp.mean(x)
    std = jnp.sqrt(jnp.sum((x - mean) ** 2) / (x.size - 1))
    ref = gamma * (x - mean) / (std + eps) + beta

    assert out.shape == x.shape
    err = float(jnp.max(jnp.abs(out - ref)))
    assert jnp.allclose(out, ref, atol=1e-5, rtol=1e-5), err

    print("KERNEL_OK")
</pallas_src>

<mosaic_0001>
module attributes {stable_mosaic.version = 11 : i64} {
  func.func @_small_kernel(%arg0: i32, %arg1: memref<1x512xf32, #tpu.memory_space<vmem>>, %arg2: memref<1x512xf32, #tpu.memory_space<vmem>>, %arg3: memref<1x512xf32, #tpu.memory_space<vmem>>, %arg4: memref<1x512xf32, #tpu.memory_space<vmem>>) attributes {dimension_semantics = [#tpu.dimension_semantics<arbitrary>], iteration_bounds = array<i64: 1>, scalar_prefetch = 0 : i64, scratch_operands = 0 : i64, tpu.core_type = #tpu.core_type<tc>, window_params = [{pipeline_mode = #tpu.pipeline_mode<synchronous>, transform_indices = @transform_0, window_bounds = array<i64: 1, 512>}, {pipeline_mode = #tpu.pipeline_mode<synchronous>, transform_indices = @transform_1, window_bounds = array<i64: 1, 512>}, {pipeline_mode = #tpu.pipeline_mode<synchronous>, transform_indices = @transform_2, window_bounds = array<i64: 1, 512>}, {pipeline_mode = #tpu.pipeline_mode<synchronous>, transform_indices = @transform_3, window_bounds = array<i64: 1, 512>}]} {
    %c0 = arith.constant 0 : index
    %c0_0 = arith.constant 0 : index
    %0 = vector.load %arg1[%c0, %c0_0] : memref<1x512xf32, #tpu.memory_space<vmem>>, vector<1x512xf32>
    %1 = vector.shape_cast %0 : vector<1x512xf32> to vector<1x1x512xf32>
    %cst = arith.constant dense<0.000000e+00> : vector<1xf32>
    %2 = vector.multi_reduction <add>, %1, %cst [1, 2] : vector<1x1x512xf32> to vector<1xf32>
    %3 = vector.shape_cast %2 : vector<1xf32> to vector<1x1x1xf32>
    %4 = vector.extract %3[0, 0, 0] : f32 from vector<1x1x1xf32>
    %5 = arith.mulf %0, %0 : vector<1x512xf32>
    %6 = vector.shape_cast %5 : vector<1x512xf32> to vector<1x1x512xf32>
    %cst_1 = arith.constant dense<0.000000e+00> : vector<1xf32>
    %7 = vector.multi_reduction <add>, %6, %cst_1 [1, 2] : vector<1x1x512xf32> to vector<1xf32>
    %8 = vector.shape_cast %7 : vector<1xf32> to vector<1x1x1xf32>
    %9 = vector.extract %8[0, 0, 0] : f32 from vector<1x1x1xf32>
    %cst_2 = arith.constant 5.120000e+02 : f32
    %10 = arith.divf %4, %cst_2 : f32
    %11 = arith.mulf %4, %10 : f32
    %12 = arith.subf %9, %11 : f32
    %cst_3 = arith.constant 5.110000e+02 : f32
    %13 = arith.divf %12, %cst_3 : f32
    %cst_4 = arith.constant 0.000000e+00 : f32
    %14 = arith.maximumf %13, %cst_4 : f32
    %15 = math.sqrt %14 : f32
    %cst_5 = arith.constant 9.99999997E-7 : f32
    %16 = arith.addf %15, %cst_5 : f32
    %cst_6 = arith.constant 1.000000e+00 : f32
    %17 = arith.divf %cst_6, %16 : f32
    %c0_7 = arith.constant 0 : index
    %c0_8 = arith.constant 0 : index
    %18 = vector.load %arg2[%c0_7, %c0_8] : memref<1x512xf32, #tpu.memory_space<vmem>>, vector<1x512xf32>
    %19 = vector.broadcast %17 : f32 to vector<1x512xf32>
    %20 = arith.mulf %18, %19 : vector<1x512xf32>
    %c0_9 = arith.constant 0 : index
    %c0_10 = arith.constant 0 : index
    %21 = vector.load %arg3[%c0_9, %c0_10] : memref<1x512xf32, #tpu.memory_space<vmem>>, vector<1x512xf32>
    %22 = vector.broadcast %10 : f32 to vector<1x512xf32>
    %23 = arith.mulf %22, %20 : vector<1x512xf32>
    %24 = arith.subf %21, %23 : vector<1x512xf32>
    %25 = arith.mulf %0, %20 : vector<1x512xf32>
    %26 = arith.addf %25, %24 : vector<1x512xf32>
    %c0_11 = arith.constant 0 : index
    %c0_12 = arith.constant 0 : index
    %27 = vector.load %arg4[%c0_11, %c0_12] : memref<1x512xf32, #tpu.memory_space<vmem>>, vector<1x512xf32>
    tpu.vector_store %arg4[%c0_11, %c0_12], %26 {strides = array<i32>} : memref<1x512xf32, #tpu.memory_space<vmem>>, vector<1x512xf32>,
    return
  }
  func.func @transform_0(%arg0: i32) -> (i32, i32) {
    %c0_i32 = arith.constant 0 : i32
    %c0_i32_0 = arith.constant 0 : i32
    %c0_i32_1 = arith.constant 0 : i32
    return %c0_i32, %c0_i32_0 : i32, i32
  }
  func.func @transform_1(%arg0: i32) -> (i32, i32) {
    %c0_i32 = arith.constant 0 : i32
    %c0_i32_0 = arith.constant 0 : i32
    %c0_i32_1 = arith.constant 0 : i32
    return %c0_i32, %c0_i32_0 : i32, i32
  }
  func.func @transform_2(%arg0: i32) -> (i32, i32) {
    %c0_i32 = arith.constant 0 : i32
    %c0_i32_0 = arith.constant 0 : i32
    %c0_i32_1 = arith.constant 0 : i32
    return %c0_i32, %c0_i32_0 : i32, i32
  }
  func.func @transform_3(%arg0: i32) -> (i32, i32) {
    %c0_i32 = arith.constant 0 : i32
    %c0_i32_0 = arith.constant 0 : i32
    %c0_i32_1 = arith.constant 0 : i32
    return %c0_i32, %c0_i32_0 : i32, i32
  }
}

</mosaic_0001>

<llo_original>
// kernel: tpu_custom_call.1
$region0: #{tpu_custom_call.1}
  #allocation0 [shape = 'u32[]', space=smem, size = 0x4, offset = 0x4, fixed_abs, tag = 'smem constant byte address 0x4 - core index']
  #allocation1 [shape = 'u32[72,128]{1,0:T(1,128)}', space=vmem, size = 0x9000, scoped, tag = 'internal scratch']
  %s0 = inlined_call_operand.hbm [shape: f32[1,512], index: 0, kind: input, shape index: {}]
  %s1 = inlined_call_operand.hbm [shape: f32[1,512], index: 1, kind: input, shape index: {}]
  %s2 = inlined_call_operand.hbm [shape: f32[1,512], index: 2, kind: input, shape index: {}]
  %s3 = inlined_call_operand.hbm [shape: f32[1,512], index: 3, kind: output, shape index: {}]
  %s4 = sld [smem:[#allocation0]]
  $region34: #{tpu_custom_call.1} parent=0
    _
  %s6 = ssub.s32 1, %s4
  %s7 = scalar_select 0, %s6, %s4
  $region1: #{tpu_custom_call.1} parent=0
    #allocation2 [shape = 'u8[2048]{0}', space=vmem, size = 0x800, scoped, tag = 'input window, operand 0, single buffered']
    #allocation3 [shape = 's32[1]{0}', space=sflag, size = 0x4, scoped, tag = 'scoped memory for tpu_custom_call.1']
    #allocation4 [shape = 's32[1]{0}', space=sflag, size = 0x4, scoped, tag = 'scoped memory for tpu_custom_call.1']
    #allocation5 [shape = 'u8[2048]{0}', space=vmem, size = 0x800, scoped, tag = 'input window, operand 1, single buffered']
    #allocation6 [shape = 's32[1]{0}', space=sflag, size = 0x4, scoped, tag = 'scoped memory for tpu_custom_call.1']
    #allocation7 [shape = 'u8[2048]{0}', space=vmem, size = 0x800, scoped, tag = 'input window, operand 2, single buffered']
    #allocation8 [shape = 'u8[2048]{0}', space=vmem, size = 0x800, scoped, tag = 'output window, operand 0, single buffered']
    %8 = vsyncpa [#allocation3], 0
    %9 = vsyncpa [#allocation6], 0
    %10 = vsyncpa [#allocation4], 0
    // Predicated region
    $region2: #{tpu_custom_call.1} parent=1 // pred_check
      _
    $region3: #{tpu_custom_call.1} parent=1 // pred_check_branch
      %12 = sbr.rel (0) target = $region5
    $region4: #{tpu_custom_call.1} parent=1 // pred_region
      %14 = vsyncadd [#allocation3], 0
      %s16 = sshll.u32 %s0, 4
      %s17 = int_to_ptr.hbm [resolvable:$true] %s16
      %s18 = sshll.u32 [#allocation2], 4
      %s19 = int_to_ptr.vmem [resolvable:$true] %s18
      %21 = dma.hbm_to_vmem [thread:$0]  %s17, 64, %s19, [#allocation3]
    $region5: #{tpu_custom_call.1} parent=1 // pred_fallthru
      _
    // Predicated region
    $region6: #{tpu_custom_call.1} parent=1 // pred_check
      _
    $region7: #{tpu_custom_call.1} parent=1 // pred_check_branch
      %23 = sbr.rel (0) target = $region9
    $region8: #{tpu_custom_call.1} parent=1 // pred_region
      %25 = vsyncadd [#allocation6], 0
      %s27 = sshll.u32 %s1, 4
      %s28 = int_to_ptr.hbm [resolvable:$true] %s27
      %s29 = sshll.u32 [#allocation5], 4
      %s30 = int_to_ptr.vmem [resolvable:$true] %s29
      %32 = dma.hbm_to_vmem [thread:$0]  %s28, 64, %s30, [#allocation6]
    $region9: #{tpu_custom_call.1} parent=1 // pred_fallthru
      _
    // Predicated region
    $region10: #{tpu_custom_call.1} parent=1 // pred_check
      _
    $region11: #{tpu_custom_call.1} parent=1 // pred_check_branch
      %34 = sbr.rel (0) target = $region13
    $region12: #{tpu_custom_call.1} parent=1 // pred_region
      %36 = vsyncadd [#allocation6], 0
      %s38 = sshll.u32 %s2, 4
      %s39 = int_to_ptr.hbm [resolvable:$true] %s38
      %s40 = sshll.u32 [#allocation7], 4
      %s41 = int_to_ptr.vmem [resolvable:$true] %s40
      %43 = dma.hbm_to_vmem [thread:$0]  %s39, 64, %s41, [#allocation6]
    $region13: #{tpu_custom_call.1} parent=1 // pred_fallthru
      _
    // Predicated region
    $region14: #{tpu_custom_call.1} parent=1 // pred_check
      _
    $region15: #{tpu_custom_call.1} parent=1 // pred_check_branch
      %45 = sbr.rel (0) target = $region17
    $region16: #{tpu_custom_call.1} parent=1 // pred_region
      %47 = dma.done [#allocation3], 64
    $region17: #{tpu_custom_call.1} parent=1 // pred_fallthru
      _
    // Predicated region
    $region18: #{tpu_custom_call.1} parent=1 // pred_check
      _
    $region19: #{tpu_custom_call.1} parent=1 // pred_check_branch
      %49 = sbr.rel (0) target = $region21
    $region20: #{tpu_custom_call.1} parent=1 // pred_region
      %51 = dma.done [#allocation6], 64
    $region21: #{tpu_custom_call.1} parent=1 // pred_fallthru
      _
    // Predicated region
    $region22: #{tpu_custom_call.1} parent=1 // pred_check
      _
    $region23: #{tpu_custom_call.1} parent=1 // pred_check_branch
      %53 = sbr.rel (0) target = $region25
    $region24: #{tpu_custom_call.1} parent=1 // pred_region
      %55 = dma.done [#allocation6], 64
    $region25: #{tpu_custom_call.1} parent=1 // pred_fallthru
      _
    %v56 = vld [vmem:[#allocation2] sm:$0xf]
    %v58 = vperm.slane %v56, 0
    %v59 = vperm.slane %v56, 1
    %v60 = vperm.slane %v56, 2
    %v61 = vperm.slane %v56, 3
    %vm66 = vcmask 1040384
    %v67 = vsel %vm66, %v58, 0.0
    %v68 = vsel %vm66, %v59, 0.0
    %v69 = vadd.f32 %v67, %v68
    %v70 = vsel %vm66, %v60, 0.0
    %v71 = vadd.f32 %v69, %v70
    %v72 = vsel %vm66, %v61, 0.0
    %v73 = vadd.f32 %v71, %v72
    %74 = vadd.xlane.f32.xlu0 %v73
    %v75 = vpop.xlane.xlu0 %74
    %v76 = vrot.slane %v75, 4
    %v77 = vadd.f32 %v75, %v76
    %v78 = vrot.slane %v77, 2
    %v79 = vadd.f32 %v77, %v78
    %v80 = vrot.slane %v79, 1
    %v81 = vadd.f32 %v79, %v80
    %s82 = vtos %v81
    %v83 = vmul.f32 %v56, %v56
    %v85 = vperm.slane %v83, 0
    %v86 = vperm.slane %v83, 1
    %v87 = vperm.slane %v83, 2
    %v88 = vperm.slane %v83, 3
    %v93 = vsel %vm66, %v85, 0.0
    %v94 = vsel %vm66, %v86, 0.0
    %v95 = vadd.f32 %v93, %v94
    %v96 = vsel %vm66, %v87, 0.0
    %v97 = vadd.f32 %v95, %v96
    %v98 = vsel %vm66, %v88, 0.0
    %v99 = vadd.f32 %v97, %v98
    %100 = vadd.xlane.f32.xlu0 %v99
    %v101 = vpop.xlane.xlu0 %100
    %v102 = vrot.slane %v101, 4
    %v103 = vadd.f32 %v101, %v102
    %v104 = vrot.slane %v103, 2
    %v105 = vadd.f32 %v103, %v104
    %v106 = vrot.slane %v105, 1
    %v107 = vadd.f32 %v105, %v106
    %s108 = vtos %v107
    %v109 = vrcp.pop 512.0
    %v110 = vmul.f32 512.0, %v109
    %v111 = vsub.f32 1.0, %v110
    %v112 = vmul.f32 %v109, %v111
    %v113 = vadd.f32 %v109, %v112
    %vm114 = vweird.f32 %v109
    %v115 = vsel %vm114, %v109, %v113
    %s116 = vtos %v115
    %s117 = smul.f32 %s82, %s116
    %s118 = smul.f32 %s82, %s117
    %s119 = ssub.f32 %s108, %s118
    %v120 = vrcp.pop 511.0
    %v121 = vmul.f32 511.0, %v120
    %v122 = vsub.f32 1.0, %v121
    %v123 = vmul.f32 %v120, %v122
    %v124 = vadd.f32 %v120, %v123
    %vm125 = vweird.f32 %v120
    %v126 = vsel %vm125, %v120, %v124
    %s127 = vtos %v126
    %s128 = smul.f32 %s119, %s127
    %s129 = smax.f32 %s128, 0.0
    %v130 = vstv %s129
    %v131 = vrsqrt.pop %v130
    %v132 = vmul.f32 %v131, %v130
    %v133 = vmul.f32 %v132, %v131
    %v134 = vmul.f32 0.5, %v133
    %v135 = vsub.f32 1.5, %v134
    %v136 = vmul.f32 %v131, %v135
    %v137 = vmul.f32 %v130, %v136
    %vm138 = vcmp.eq.f32.partialorder %v130, inf
    %v139 = vsel %vm138, %v130, %v137
    %vm140 = vcmp.eq.f32.partialorder %v130, 0.0
    %v141 = vand.u32 %v130, 2147483648
    %v142 = vsel %vm140, %v141, %v139
    %s143 = vtos %v142
    %s144 = sadd.f32 %s143, 1e-06
    %v145 = vstv %s144
    %v146 = vrcp.pop %v145
    %v147 = vmul.f32 %v145, %v146
    %v148 = vsub.f32 1.0, %v147
    %v149 = vmul.f32 %v146, %v148
    %v150 = vadd.f32 %v146, %v149
    %vm151 = vweird.f32 %v145
    %vm152 = vweird.f32 %v146
    %vm153 = vmor %vm151, %vm152
    %v154 = vsel %vm153, %v146, %v150
    %v155 = vand.u32 2147483647, %v145
    %vm156 = vcmp.eq.f32.partialorder %v155, 8.507059e+37
    %v157 = vand.u32 %v145, 2147483648
    %v158 = vor.u32 1.1754944e-38, %v157
    %v159 = vsel %vm156, %v158, %v154
    %s160 = vtos %v159
    %v161 = vld [vmem:[#allocation5] sm:$0xf]
    %v162 = vstv %s160
    %v163 = vmul.f32 %v161, %v162
    %v164 = vld [vmem:[#allocation7] sm:$0xf]
    %v165 = vstv %s117
    %v166 = vmul.f32 %v165, %v163
    %v167 = vsub.f32 %v164, %v166
    %v168 = vmul.f32 %v56, %v163
    %v169 = vadd.f32 %v168, %v167
    %v170 = vlaneseq
    %vm171 = vcmp.ge.s32.totalorder %v170, 0
    %vm172 = vcmp.lt.s32.totalorder %v170, 512
    %vm173 = vmand %vm171, %vm172
    %174 = vst.msk [vmem:[#allocation8] sm:$0xf] %vm173, %v169
    // Predicated region
    $region26: #{tpu_custom_call.1} parent=1 // pred_check
      _
    $region27: #{tpu_custom_call.1} parent=1 // pred_check_branch
      %176 = sbr.rel (0) target = $region29
    $region28: #{tpu_custom_call.1} parent=1 // pred_region
      %178 = vsyncadd [#allocation4], 0
      %s180 = sshll.u32 [#allocation8], 4
      %s181 = int_to_ptr.vmem [resolvable:$true] %s180
      %s182 = sshll.u32 %s3, 4
      %s183 = int_to_ptr.hbm [resolvable:$true] %s182
      %185 = dma.vmem_to_hbm [thread:$0]  %s181, 64, %s183, [#allocation4]
    $region29: #{tpu_custom_call.1} parent=1 // pred_fallthru
      _
    // Predicated region
    $region30: #{tpu_custom_call.1} parent=1 // pred_check
      _
    $region31: #{tpu_custom_call.1} parent=1 // pred_check_branch
      %187 = sbr.rel (0) target = $region33
    $region32: #{tpu_custom_call.1} parent=1 // pred_region
      %189 = dma.done [#allocation4], 64
    $region33: #{tpu_custom_call.1} parent=1 // pred_fallthru
      _
    %190 = vsyncpa [#allocation3], 1
    %191 = vsyncpa [#allocation6], 1
    %192 = vsyncpa [#allocation4], 1

</llo_original>
